<compile_context>
chip_gen: v7x
topology: tpu7x:2x2x1
jax: 0.10.0
libtpu: 0.0.40
codegen_flags: <defaults>
</compile_context>

<pallas_src>
import jax
import jax.numpy as jnp
from jax.experimental import pallas as pl
from jax.experimental.pallas import tpu as pltpu


def _round_up(n: int, m: int) -> int:
    return ((n + m - 1) // m) * m


def _cls_head_kernel(x_ref, w_ref, b_ref, o_ref):
    # x_ref: (TB, H) CLS rows   w_ref: (2, H)   b_ref: (1, 2) in SMEM (f32)
    # o_ref: (TB, 2) log-probabilities
    x = x_ref[...].astype(jnp.float32)            # one cast per tile (v5e friendly)
    w = w_ref[...].astype(jnp.float32)

    # d = z1 - z0: single VPU multiply + lane reduction (f32 accumulate).
    wd = w[1:2, :] - w[0:1, :]                                      # (1, H)
    bd = b_ref[0, 1] - b_ref[0, 0]                                  # scalar (SMEM)
    d = jnp.sum(x * wd, axis=-1, keepdims=True) + bd                # (TB, 1)

    # 2-class log-softmax, elementwise & numerically stable:
    #   out0 = z0 - lse = -softplus(d)
    #   out1 = z1 - lse = -softplus(-d)
    # softplus(t) = max(t, 0) + log1p(exp(-|t|))
    log_term = jnp.log1p(jnp.exp(-jnp.abs(d)))
    out0 = -(jnp.maximum(d, 0.0) + log_term)
    out1 = -(jnp.maximum(-d, 0.0) + log_term)

    o_ref[...] = jnp.concatenate([out0, out1], axis=-1).astype(o_ref.dtype)


def block_in_same_graph(x, weight, bias, *, max_tb: int = 1024,
                        vmem_buf_bytes: int = 4 << 20):
    """Forward of BlockInSameGraph.

    x:      (B, S, H)  activations (CLS token at sequence position 0)
    weight: (2, H)     nn.Linear(hidden, 2).weight (PyTorch layout)
    bias:   (2,)       nn.Linear(hidden, 2).bias
    returns (B, 2)     log-probabilities
    """
    B, S, H = x.shape

    # Only the CLS rows ever reach the kernel (S-fold HBM traffic reduction).
    x_cls = x[:, 0, :]                              # (B, H)

    # Batch tile: multiple of 8, capped so a single double-buffered input
    # block stays within ~vmem_buf_bytes (keeps us inside scoped-VMEM defaults
    # for large H without flags), and never larger than the padded batch.
    itemsize = jnp.dtype(x.dtype).itemsize
    tb = (vmem_buf_bytes // max(H * itemsize, 1)) // 8 * 8
    tb = max(8, min(max_tb, tb))
    tb = min(tb, _round_up(B, 8))

    # Pad B so blocks divide evenly (no masked partial stores); slice back off.
    b_pad = _round_up(B, tb)
    if b_pad != B:
        x_cls = jnp.pad(x_cls, ((0, b_pad - B), (0, 0)))

    b2 = bias.astype(jnp.float32).reshape(1, 2)
    grid = (b_pad // tb,)

    out = pl.pallas_call(
        _cls_head_kernel,
        out_shape=jax.ShapeDtypeStruct((b_pad, 2), x.dtype),
        grid=grid,
        in_specs=[
            pl.BlockSpec((tb, H), lambda i: (i, 0)),                 # CLS rows, tiled over B
            pl.BlockSpec((2, H), lambda i: (0, 0)),                  # weight, resident
            pl.BlockSpec(memory_space=pltpu.MemorySpace.SMEM),       # bias scalars
        ],
        out_specs=pl.BlockSpec((tb, 2), lambda i: (i, 0)),
        compiler_params=pltpu.CompilerParams(
            dimension_semantics=("parallel",),                       # megacore on v7x
        ),
    )(x_cls, weight, b2)

    return out[:B]


if __name__ == "__main__":
    B, S, H = 2, 8, 32

    key = jax.random.PRNGKey(0)
    k_x, k_w, k_b = jax.random.split(key, 3)

    # Deterministic synthetic parameters (shapes from nn.Linear(hidden, 2)).
    x = jax.random.normal(k_x, (B, S, H), dtype=jnp.float32)
    weight = (jax.random.normal(k_w, (2, H), dtype=jnp.float32)
              * (1.0 / jnp.sqrt(H)))               # PyTorch layout [2, H]
    bias = jax.random.normal(k_b, (2,), dtype=jnp.float32) * 0.01

    out = jax.block_until_ready(block_in_same_graph(x, weight, bias))

    # Reference check in plain JAX.
    ref_logits = x[:, 0] @ weight.T + bias
    ref = jax.nn.log_softmax(ref_logits, axis=-1)
    assert out.shape == (B, 2)
    assert jnp.allclose(out, ref, atol=1e-5, rtol=1e-5)

    print("KERNEL_OK")
</pallas_src>

<mosaic_0001>
module attributes {stable_mosaic.version = 11 : i64} {
  func.func @_cls_head_kernel(%arg0: i32, %arg1: memref<8x32xf32, #tpu.memory_space<vmem>>, %arg2: memref<2x32xf32, #tpu.memory_space<vmem>>, %arg3: memref<1x2xf32, #tpu.memory_space<smem>>, %arg4: memref<8x2xf32, #tpu.memory_space<vmem>>) attributes {dimension_semantics = [#tpu.dimension_semantics<parallel>], iteration_bounds = array<i64: 1>, scalar_prefetch = 0 : i64, scratch_operands = 0 : i64, tpu.core_type = #tpu.core_type<tc>, window_params = [{transform_indices = @transform_0, window_bounds = array<i64: 8, 32>}, {pipeline_mode = #tpu.pipeline_mode<synchronous>, transform_indices = @transform_1, window_bounds = array<i64: 2, 32>}, {transform_indices = @transform_2, window_bounds = array<i64: 1, 2>}, {transform_indices = @transform_3, window_bounds = array<i64: 8, 2>}]} {
    %c0 = arith.constant 0 : index
    %c0_0 = arith.constant 0 : index
    %0 = vector.load %arg1[%c0, %c0_0] : memref<8x32xf32, #tpu.memory_space<vmem>>, vector<8x32xf32>
    %c0_1 = arith.constant 0 : index
    %c0_2 = arith.constant 0 : index
    %1 = vector.load %arg2[%c0_1, %c0_2] : memref<2x32xf32, #tpu.memory_space<vmem>>, vector<2x32xf32>
    %2 = vector.extract_strided_slice %1 {offsets = [1, 0], sizes = [1, 32], strides = [1, 1]} : vector<2x32xf32> to vector<1x32xf32>
    %3 = vector.extract_strided_slice %1 {offsets = [0, 0], sizes = [1, 32], strides = [1, 1]} : vector<2x32xf32> to vector<1x32xf32>
    %4 = arith.subf %2, %3 : vector<1x32xf32>
    %c0_3 = arith.constant 0 : index
    %c1 = arith.constant 1 : index
    %5 = memref.load %arg3[%c0_3, %c1] : memref<1x2xf32, #tpu.memory_space<smem>>
    %c0_4 = arith.constant 0 : index
    %c0_5 = arith.constant 0 : index
    %6 = memref.load %arg3[%c0_4, %c0_5] : memref<1x2xf32, #tpu.memory_space<smem>>
    %7 = arith.subf %5, %6 : f32
    %8 = vector.broadcast %4 : vector<1x32xf32> to vector<8x32xf32>
    %9 = arith.mulf %0, %8 : vector<8x32xf32>
    %cst = arith.constant dense<0.000000e+00> : vector<8xf32>
    %10 = vector.multi_reduction <add>, %9, %cst [1] : vector<8x32xf32> to vector<8xf32>
    %11 = vector.shape_cast %10 : vector<8xf32> to vector<8x1xf32>
    %12 = vector.broadcast %7 : f32 to vector<8x1xf32>
    %13 = arith.addf %11, %12 : vector<8x1xf32>
    %14 = math.absf %13 : vector<8x1xf32>
    %cst_6 = arith.constant 0.000000e+00 : f32
    %15 = vector.broadcast %cst_6 : f32 to vector<8x1xf32>
    %16 = arith.subf %15, %14 : vector<8x1xf32>
    %17 = math.exp %16 : vector<8x1xf32>
    %18 = math.log1p %17 : vector<8x1xf32>
    %cst_7 = arith.constant 0.000000e+00 : f32
    %19 = vector.broadcast %cst_7 : f32 to vector<8x1xf32>
    %20 = arith.maximumf %13, %19 : vector<8x1xf32>
    %21 = arith.addf %20, %18 : vector<8x1xf32>
    %cst_8 = arith.constant 0.000000e+00 : f32
    %22 = vector.broadcast %cst_8 : f32 to vector<8x1xf32>
    %23 = arith.subf %22, %21 : vector<8x1xf32>
    %cst_9 = arith.constant 0.000000e+00 : f32
    %24 = vector.broadcast %cst_9 : f32 to vector<8x1xf32>
    %25 = arith.subf %24, %13 : vector<8x1xf32>
    %cst_10 = arith.constant 0.000000e+00 : f32
    %26 = vector.broadcast %cst_10 : f32 to vector<8x1xf32>
    %27 = arith.maximumf %25, %26 : vector<8x1xf32>
    %28 = arith.addf %27, %18 : vector<8x1xf32>
    %cst_11 = arith.constant 0.000000e+00 : f32
    %29 = vector.broadcast %cst_11 : f32 to vector<8x1xf32>
    %30 = arith.subf %29, %28 : vector<8x1xf32>
    %31 = tpu.concatenate %23, %30 in 1 : vector<8x1xf32>, vector<8x1xf32> -> vector<8x2xf32>
    %c0_12 = arith.constant 0 : index
    %c0_13 = arith.constant 0 : index
    %32 = vector.load %arg4[%c0_12, %c0_13] : memref<8x2xf32, #tpu.memory_space<vmem>>, vector<8x2xf32>
    tpu.vector_store %arg4[%c0_12, %c0_13], %31 {strides = array<i32>} : memref<8x2xf32, #tpu.memory_space<vmem>>, vector<8x2xf32>,
    return
  }
  func.func @transform_0(%arg0: i32) -> (i32, i32) {
    %c0_i32 = arith.constant 0 : i32
    %c0_i32_0 = arith.constant 0 : i32
    return %arg0, %c0_i32 : i32, i32
  }
  func.func @transform_1(%arg0: i32) -> (i32, i32) {
    %c0_i32 = arith.constant 0 : i32
    %c0_i32_0 = arith.constant 0 : i32
    %c0_i32_1 = arith.constant 0 : i32
    return %c0_i32, %c0_i32_0 : i32, i32
  }
  func.func @transform_2(%arg0: i32) -> (i32, i32) {
    %c0_i32 = arith.constant 0 : i32
    %c0_i32_0 = arith.constant 0 : i32
    %c0_i32_1 = arith.constant 0 : i32
    return %c0_i32, %c0_i32_0 : i32, i32
  }
  func.func @transform_3(%arg0: i32) -> (i32, i32) {
    %c0_i32 = arith.constant 0 : i32
    %c0_i32_0 = arith.constant 0 : i32
    return %arg0, %c0_i32 : i32, i32
  }
}

</mosaic_0001>

<llo_original>
// kernel: tpu_custom_call.1
$region0: #{tpu_custom_call.1}
  #allocation0 [shape = 'u32[]', space=smem, size = 0x4, offset = 0x4, fixed_abs, tag = 'smem constant byte address 0x4 - core index']
  #allocation1 [shape = 'u32[144,128]{1,0:T(1,128)}', space=vmem, size = 0x12000, scoped, tag = 'internal scratch']
  %s0 = inlined_call_operand.hbm [shape: f32[8,32], index: 0, kind: input, shape index: {}]
  %s1 = inlined_call_operand.vmem [shape: f32[2,32], index: 1, kind: input, shape index: {}]
  %s2 = inlined_call_operand.vmem [shape: f32[1,2], index: 2, kind: input, shape index: {}]
  %s3 = inlined_call_operand.vmem [shape: f32[8,2], index: 3, kind: output, shape index: {}]
  %s4 = sld [smem:[#allocation0]]
  $region30: #{tpu_custom_call.1} parent=0
    _
  %s6 = ssub.s32 1, %s4
  %s7 = scalar_select 0, %s6, %s4
  $region1: #{tpu_custom_call.1} parent=0
    #allocation2 [shape = 'u8[4096]{0}', space=vmem, size = 0x1000, scoped, tag = 'input window, operand 0, single buffered']
    #allocation3 [shape = 's32[1]{0}', space=sflag, size = 0x4, scoped, tag = 'scoped memory for tpu_custom_call.1']
    #allocation4 [shape = 's32[1]{0}', space=sflag, size = 0x4, scoped, tag = 'scoped memory for tpu_custom_call.1']
    #allocation5 [shape = 'u8[512]{0}', space=smem, size = 0x200, scoped, tag = 'input window, operand 2, single buffered']
    %8 = vsyncpa [#allocation3], 0
    %9 = vsyncpa [#allocation4], 0
    // Predicated region
    $region2: #{tpu_custom_call.1} parent=1 // pred_check
      _
    $region3: #{tpu_custom_call.1} parent=1 // pred_check_branch
      %11 = sbr.rel (0) target = $region5
    $region4: #{tpu_custom_call.1} parent=1 // pred_region
      %s13 = ssub.s32 128, 128
      %14 = vsyncadd [#allocation3], %s13
      %s16 = sshll.u32 [#allocation2], 4
      %s17 = int_to_ptr.vmem [resolvable:$true] %s16
      %19 = dma.hbm_to_vmem [thread:$0]  %s0, 128, %s17, [#allocation3]
    $region5: #{tpu_custom_call.1} parent=1 // pred_fallthru
      _
    // Predicated region
    $region6: #{tpu_custom_call.1} parent=1 // pred_check
      _
    $region7: #{tpu_custom_call.1} parent=1 // pred_check_branch
      %21 = sbr.rel (0) target = $region9
    $region8: #{tpu_custom_call.1} parent=1 // pred_region
      _
    $region9: #{tpu_custom_call.1} parent=1 // pred_fallthru
      _
    // Predicated region
    $region10: #{tpu_custom_call.1} parent=1 // pred_check
      _
    $region11: #{tpu_custom_call.1} parent=1 // pred_check_branch
      %23 = sbr.rel (0) target = $region13
    $region12: #{tpu_custom_call.1} parent=1 // pred_region
      %s25 = ssub.s32 16, 16
      %26 = vsyncadd [#allocation4], %s25
      %s28 = sshll.u32 %s2, 4
      %s29 = int_to_ptr.vmem [resolvable:$true] %s28
      %31 = dma.vmem_to_smem %s29, 16, [#allocation5], [#allocation4]
    $region13: #{tpu_custom_call.1} parent=1 // pred_fallthru
      _
    // Predicated region
    $region14: #{tpu_custom_call.1} parent=1 // pred_check
      _
    $region15: #{tpu_custom_call.1} parent=1 // pred_check_branch
      %33 = sbr.rel (0) target = $region17
    $region16: #{tpu_custom_call.1} parent=1 // pred_region
      %34 = dma.done [#allocation3], 128
    $region17: #{tpu_custom_call.1} parent=1 // pred_fallthru
      _
    // Predicated region
    $region18: #{tpu_custom_call.1} parent=1 // pred_check
      _
    $region19: #{tpu_custom_call.1} parent=1 // pred_check_branch
      %36 = sbr.rel (0) target = $region21
    $region20: #{tpu_custom_call.1} parent=1 // pred_region
      %37 = dma.done [#allocation4], 16
    $region21: #{tpu_custom_call.1} parent=1 // pred_fallthru
      _
    %38 = sfence
    %v39 = vld [vmem:[#allocation2] sm:$0xff]
    %v40 = vld [vmem:[%s1] sm:$0x3]
    %v42 = vrot.slane %v40, 7
    %v44 = vsub.f32 %v40, %v42
    %s45 = sld [smem:[#allocation5 + $0x1]]
    %s46 = sld [smem:[#allocation5]]
    %s47 = ssub.f32 %s45, %s46
    %v48 = vlaneseq
    %v49 = vshrl.u32 %v48, 7
    %v50 = vsub.s32 1, %v49
    %v51 = vrot.slane %v44, %v50
    %v52 = vmul.f32 %v39, %v51
    %vm53 = vcmask 261120
    %v54 = vsel %vm53, %v52, 0.0
    %55 = vadd.xlane.f32.xlu0 %v54
    %v56 = vpop.xlane.xlu0 %55
    %v57 = vstv %s47
    %v58 = vadd.f32 %v56, %v57
    %v59 = vand.u32 2147483647, %v58
    %v60 = vsub.f32 0.0, %v59
    %v61 = vmul.f32 %v60, 1.442695
    %v62 = vpow.pop %v61
    %v63 = vadd.f32 %v62, 1.0
    %v64 = vlog2.pop %v63
    %v65 = vmul.f32 %v64, 0.6931472
    %v66 = vmul.f32 -0.5, %v62
    %v67 = vadd.f32 %v66, 1.0
    %v68 = vmul.f32 %v67, %v62
    %v69 = vand.u32 2147483647, %v62
    %vm70 = vcmp.lt.f32.partialorder %v69, 0.0004427343
    %v71 = vsel %vm70, %v68, %v65
    %v72 = vmax.f32 %v58, 0.0
    %v73 = vadd.f32 %v72, %v71
    %v74 = vsub.f32 0.0, %v73
    %v75 = vsub.f32 0.0, %v58
    %v76 = vmax.f32 %v75, 0.0
    %v77 = vadd.f32 %v76, %v71
    %v78 = vsub.f32 0.0, %v77
    %vm79 = vcmask 7168
    %v80 = vsel %vm79, %v74, %v78
    %vm81 = vcmask 15360
    %82 = vst.msk [vmem:[%s3] sm:$0xff] %vm81, %v80
    // Predicated region
    $region22: #{tpu_custom_call.1} parent=1 // pred_check
      _
    $region23: #{tpu_custom_call.1} parent=1 // pred_check_branch
      %84 = sbr.rel (0) target = $region25
    $region24: #{tpu_custom_call.1} parent=1 // pred_region
      _
    $region25: #{tpu_custom_call.1} parent=1 // pred_fallthru
      _
    // Predicated region
    $region26: #{tpu_custom_call.1} parent=1 // pred_check
      _
    $region27: #{tpu_custom_call.1} parent=1 // pred_check_branch
      %86 = sbr.rel (0) target = $region29
    $region28: #{tpu_custom_call.1} parent=1 // pred_region
      _
    $region29: #{tpu_custom_call.1} parent=1 // pred_fallthru
      _
    %87 = vsyncpa [#allocation3], 1
    %88 = vsyncpa [#allocation4], 1

</llo_original>
